<compile_context>
chip_gen: v7x
topology: tpu7x:2x2x1
jax: 0.10.0
libtpu: 0.0.40
codegen_flags: <defaults>
</compile_context>

<pallas_src>
import jax
import jax.numpy as jnp
from jax.experimental import pallas as pl
from jax.experimental.pallas import tpu as pltpu

# Constants (NUM_RGBXYZ_FEATURE / NUM_FUSION_FEATURE not fixed by the snippet;
# small consistent values for this synthetic kernel).
NUM_RGBXYZ_FEATURE = 6      # RGB + XYZ feature per point (F_in)
NUM_FUSION_FEATURE = 32
NUM_SAMPLE = 200
NUM_CLASSES = 2

F_PAD = 8                   # pad feature (sublane) axis 6 -> 8


def _objectness_head_kernel(x_ref, w_ref, b_ref, out_ref):
    """Single-invocation head: folded affine map + 2-class softmax.

    x_ref   : (F_PAD, R_PAD)        VMEM f32  -- rows on lanes, features on sublanes
    w_ref   : (NUM_CLASSES, F_PAD)  SMEM f32  -- folded W_eff^T (zero-padded cols)
    b_ref   : (NUM_CLASSES,)        SMEM f32  -- folded bias
    out_ref : (NUM_CLASSES, R_PAD)  VMEM f32  -- softmax probs, rows on lanes
    """
    # Unrolled VPU broadcast multiply-adds: 2 classes x F_in terms = 12 FMAs,
    # each across the full lane-dense row slab. Weights/bias come from SMEM scalars.
    acc0 = x_ref[0:1, :] * w_ref[0, 0] + b_ref[0]          # (1, R_PAD)
    acc1 = x_ref[0:1, :] * w_ref[1, 0] + b_ref[1]          # (1, R_PAD)
    for k in range(1, NUM_RGBXYZ_FEATURE):                 # static unroll
        xk = x_ref[k:k + 1, :]
        acc0 = acc0 + xk * w_ref[0, k]
        acc1 = acc1 + xk * w_ref[1, k]

    # Exact, numerically-stable 2-class softmax — fully elementwise (no XLU
    # cross-lane reductions): max / exp / reciprocal over the two class rows.
    m = jnp.maximum(acc0, acc1)
    e0 = jnp.exp(acc0 - m)
    e1 = jnp.exp(acc1 - m)
    inv = pl.reciprocal(e0 + e1, approx=False)
    out_ref[0:1, :] = e0 * inv
    out_ref[1:2, :] = e1 * inv


@jax.jit
def objectness_forward(x_sampled, params):
    """x_sampled: (B, N, F_in) float32 -> objectness_pred: (B, N, 2) float32."""
    B, N, F_in = x_sampled.shape
    assert F_in == NUM_RGBXYZ_FEATURE
    w1, b1, w2, b2, w3, b3, w4, b4 = params

    # --- Fold the 4 bias-affine Linear layers into one (exact: no nonlinearity). ---
    w_eff = w1 @ w2 @ w3 @ w4                               # (F_in, 2)
    b_eff = ((b1 @ w2 + b2) @ w3 + b3) @ w4 + b4            # (1, 2)

    # --- Lane-dense layout: flatten batch, rows -> lanes (pad to multiple of 128),
    #     features -> sublanes (pad 6 -> 8). Pure layout plumbing in the wrapper. ---
    rows = B * N
    r_pad = max(128, ((rows + 127) // 128) * 128)
    x_flat = x_sampled.reshape(rows, F_in).astype(jnp.float32)
    x_t = jnp.zeros((F_PAD, r_pad), jnp.float32).at[:F_in, :rows].set(x_flat.T)

    w_t = jnp.zeros((NUM_CLASSES, F_PAD), jnp.float32).at[:, :F_in].set(
        w_eff.T.astype(jnp.float32))
    b_vec = b_eff.reshape(NUM_CLASSES).astype(jnp.float32)

    out_t = pl.pallas_call(
        _objectness_head_kernel,
        out_shape=jax.ShapeDtypeStruct((NUM_CLASSES, r_pad), jnp.float32),
        in_specs=[
            pl.BlockSpec(memory_space=pltpu.MemorySpace.VMEM),   # x_t  (full array)
            pl.BlockSpec(memory_space=pltpu.MemorySpace.SMEM),   # folded weights
            pl.BlockSpec(memory_space=pltpu.MemorySpace.SMEM),   # folded bias
        ],
        out_specs=pl.BlockSpec(memory_space=pltpu.MemorySpace.VMEM),
    )(x_t, w_t, b_vec)

    # Transpose / unpad back to the module's (B, N, 2) layout.
    return out_t[:, :rows].T.reshape(B, N, NUM_CLASSES)


def init_params(key):
    """Deterministic nn.Linear-style init (uniform(-1/sqrt(fan_in), +1/sqrt(fan_in)))."""
    dims = [(NUM_RGBXYZ_FEATURE, NUM_FUSION_FEATURE),
            (NUM_FUSION_FEATURE, NUM_FUSION_FEATURE),
            (NUM_FUSION_FEATURE, NUM_FUSION_FEATURE),
            (NUM_FUSION_FEATURE, NUM_CLASSES)]
    params = []
    for (fan_in, fan_out) in dims:
        key, kw, kb = jax.random.split(key, 3)
        bound = 1.0 / jnp.sqrt(jnp.float32(fan_in))
        w = jax.random.uniform(kw, (fan_in, fan_out), jnp.float32, -bound, bound)
        b = jax.random.uniform(kb, (1, fan_out), jnp.float32, -bound, bound)
        params += [w, b]
    return tuple(params)


def reference_forward(x_sampled, params):
    """Pure-JAX reference of the ORIGINAL (unfolded) forward: 4 Linears + softmax."""
    w1, b1, w2, b2, w3, b3, w4, b4 = params
    h = x_sampled @ w1 + b1[0]
    h = h @ w2 + b2[0]
    h = h @ w3 + b3[0]
    logits = h @ w4 + b4[0]
    return jax.nn.softmax(logits, axis=-1)


if __name__ == "__main__":
    key = jax.random.PRNGKey(0)
    k_params, k_feat, k_lbl, k_samp = jax.random.split(key, 4)

    params = init_params(k_params)

    # Synthetic feature_dict / batch_data_dict contents. The per-batch slicing,
    # torch.randint sampling and label gather are glue done in host-side JAX
    # (data-dependent gather, not the compute hot path).
    batch_num = 2
    num_points = jnp.array([300, 250], dtype=jnp.int32)
    start_idx = jnp.array([0, 300], dtype=jnp.int32)
    total_points = int(jnp.sum(num_points))

    soutput_f = jax.random.normal(k_feat, (total_points, NUM_RGBXYZ_FEATURE),
                                  dtype=jnp.float32)
    objectness_labels = jax.random.randint(k_lbl, (total_points,), 0, 2,
                                           dtype=jnp.int32)

    x_list, lbl_list = [], []
    for b in range(batch_num):
        s = int(start_idx[b])
        n = int(num_points[b])
        feat_b = soutput_f[s:s + n]
        lbl_b = objectness_labels[s:s + n]
        k_samp, k_b = jax.random.split(k_samp)
        sample_idx = jax.random.randint(k_b, (NUM_SAMPLE,), 0, n, dtype=jnp.int32)
        x_list.append(feat_b[sample_idx])
        lbl_list.append(lbl_b[sample_idx])
    x_sampled = jnp.stack(x_list)            # (B, NUM_SAMPLE, F_in)
    objectness_label = jnp.stack(lbl_list)   # (B, NUM_SAMPLE)

    # Pallas hot path: folded affine head + 2-class softmax.
    objectness_pred = objectness_forward(x_sampled, params)
    objectness_pred = jax.block_until_ready(objectness_pred)

    ret_dict = {
        "objectness_pred": objectness_pred,    # (B, NUM_SAMPLE, 2)
        "objectness_label": objectness_label,  # (B, NUM_SAMPLE)
    }

    # Verify against the unfolded pure-JAX reference. Tolerance 1e-4 accounts for
    # the (exact-in-algebra, rounding-different) weight folding.
    ref = reference_forward(x_sampled, params)
    assert ret_dict["objectness_pred"].shape == (batch_num, NUM_SAMPLE, NUM_CLASSES)
    assert ret_dict["objectness_label"].shape == (batch_num, NUM_SAMPLE)
    assert jnp.allclose(objectness_pred, ref, atol=1e-4, rtol=1e-4)
    assert jnp.allclose(jnp.sum(objectness_pred, axis=-1), 1.0, atol=1e-5)

    print("KERNEL_OK")
</pallas_src>

<mosaic_0001>
module attributes {stable_mosaic.version = 11 : i64} {
  func.func @_objectness_head_kernel(%arg0: memref<8x512xf32, #tpu.memory_space<vmem>>, %arg1: memref<2x8xf32, #tpu.memory_space<smem>>, %arg2: memref<2xf32, #tpu.memory_space<smem>>, %arg3: memref<2x512xf32, #tpu.memory_space<vmem>>) attributes {dimension_semantics = [], scalar_prefetch = 0 : i64, scratch_operands = 0 : i64, tpu.core_type = #tpu.core_type<tc>} {
    %c0 = arith.constant 0 : index
    %c0_0 = arith.constant 0 : index
    %0 = vector.load %arg0[%c0, %c0_0] : memref<8x512xf32, #tpu.memory_space<vmem>>, vector<1x512xf32>
    %c0_1 = arith.constant 0 : index
    %c0_2 = arith.constant 0 : index
    %1 = memref.load %arg1[%c0_1, %c0_2] : memref<2x8xf32, #tpu.memory_space<smem>>
    %2 = vector.broadcast %1 : f32 to vector<1x512xf32>
    %3 = arith.mulf %0, %2 : vector<1x512xf32>
    %c0_3 = arith.constant 0 : index
    %4 = memref.load %arg2[%c0_3] : memref<2xf32, #tpu.memory_space<smem>>
    %5 = vector.broadcast %4 : f32 to vector<1x512xf32>
    %6 = arith.addf %3, %5 : vector<1x512xf32>
    %c0_4 = arith.constant 0 : index
    %c0_5 = arith.constant 0 : index
    %7 = vector.load %arg0[%c0_4, %c0_5] : memref<8x512xf32, #tpu.memory_space<vmem>>, vector<1x512xf32>
    %c1 = arith.constant 1 : index
    %c0_6 = arith.constant 0 : index
    %8 = memref.load %arg1[%c1, %c0_6] : memref<2x8xf32, #tpu.memory_space<smem>>
    %9 = vector.broadcast %8 : f32 to vector<1x512xf32>
    %10 = arith.mulf %7, %9 : vector<1x512xf32>
    %c1_7 = arith.constant 1 : index
    %11 = memref.load %arg2[%c1_7] : memref<2xf32, #tpu.memory_space<smem>>
    %12 = vector.broadcast %11 : f32 to vector<1x512xf32>
    %13 = arith.addf %10, %12 : vector<1x512xf32>
    %c1_8 = arith.constant 1 : index
    %c0_9 = arith.constant 0 : index
    %14 = vector.load %arg0[%c1_8, %c0_9] : memref<8x512xf32, #tpu.memory_space<vmem>>, vector<1x512xf32>
    %c0_10 = arith.constant 0 : index
    %c1_11 = arith.constant 1 : index
    %15 = memref.load %arg1[%c0_10, %c1_11] : memref<2x8xf32, #tpu.memory_space<smem>>
    %16 = vector.broadcast %15 : f32 to vector<1x512xf32>
    %17 = arith.mulf %14, %16 : vector<1x512xf32>
    %18 = arith.addf %6, %17 : vector<1x512xf32>
    %c1_12 = arith.constant 1 : index
    %c1_13 = arith.constant 1 : index
    %19 = memref.load %arg1[%c1_12, %c1_13] : memref<2x8xf32, #tpu.memory_space<smem>>
    %20 = vector.broadcast %19 : f32 to vector<1x512xf32>
    %21 = arith.mulf %14, %20 : vector<1x512xf32>
    %22 = arith.addf %13, %21 : vector<1x512xf32>
    %c2 = arith.constant 2 : index
    %c0_14 = arith.constant 0 : index
    %23 = vector.load %arg0[%c2, %c0_14] : memref<8x512xf32, #tpu.memory_space<vmem>>, vector<1x512xf32>
    %c0_15 = arith.constant 0 : index
    %c2_16 = arith.constant 2 : index
    %24 = memref.load %arg1[%c0_15, %c2_16] : memref<2x8xf32, #tpu.memory_space<smem>>
    %25 = vector.broadcast %24 : f32 to vector<1x512xf32>
    %26 = arith.mulf %23, %25 : vector<1x512xf32>
    %27 = arith.addf %18, %26 : vector<1x512xf32>
    %c1_17 = arith.constant 1 : index
    %c2_18 = arith.constant 2 : index
    %28 = memref.load %arg1[%c1_17, %c2_18] : memref<2x8xf32, #tpu.memory_space<smem>>
    %29 = vector.broadcast %28 : f32 to vector<1x512xf32>
    %30 = arith.mulf %23, %29 : vector<1x512xf32>
    %31 = arith.addf %22, %30 : vector<1x512xf32>
    %c3 = arith.constant 3 : index
    %c0_19 = arith.constant 0 : index
    %32 = vector.load %arg0[%c3, %c0_19] : memref<8x512xf32, #tpu.memory_space<vmem>>, vector<1x512xf32>
    %c0_20 = arith.constant 0 : index
    %c3_21 = arith.constant 3 : index
    %33 = memref.load %arg1[%c0_20, %c3_21] : memref<2x8xf32, #tpu.memory_space<smem>>
    %34 = vector.broadcast %33 : f32 to vector<1x512xf32>
    %35 = arith.mulf %32, %34 : vector<1x512xf32>
    %36 = arith.addf %27, %35 : vector<1x512xf32>
    %c1_22 = arith.constant 1 : index
    %c3_23 = arith.constant 3 : index
    %37 = memref.load %arg1[%c1_22, %c3_23] : memref<2x8xf32, #tpu.memory_space<smem>>
    %38 = vector.broadcast %37 : f32 to vector<1x512xf32>
    %39 = arith.mulf %32, %38 : vector<1x512xf32>
    %40 = arith.addf %31, %39 : vector<1x512xf32>
    %c4 = arith.constant 4 : index
    %c0_24 = arith.constant 0 : index
    %41 = vector.load %arg0[%c4, %c0_24] : memref<8x512xf32, #tpu.memory_space<vmem>>, vector<1x512xf32>
    %c0_25 = arith.constant 0 : index
    %c4_26 = arith.constant 4 : index
    %42 = memref.load %arg1[%c0_25, %c4_26] : memref<2x8xf32, #tpu.memory_space<smem>>
    %43 = vector.broadcast %42 : f32 to vector<1x512xf32>
    %44 = arith.mulf %41, %43 : vector<1x512xf32>
    %45 = arith.addf %36, %44 : vector<1x512xf32>
    %c1_27 = arith.constant 1 : index
    %c4_28 = arith.constant 4 : index
    %46 = memref.load %arg1[%c1_27, %c4_28] : memref<2x8xf32, #tpu.memory_space<smem>>
    %47 = vector.broadcast %46 : f32 to vector<1x512xf32>
    %48 = arith.mulf %41, %47 : vector<1x512xf32>
    %49 = arith.addf %40, %48 : vector<1x512xf32>
    %c5 = arith.constant 5 : index
    %c0_29 = arith.constant 0 : index
    %50 = vector.load %arg0[%c5, %c0_29] : memref<8x512xf32, #tpu.memory_space<vmem>>, vector<1x512xf32>
    %c0_30 = arith.constant 0 : index
    %c5_31 = arith.constant 5 : index
    %51 = memref.load %arg1[%c0_30, %c5_31] : memref<2x8xf32, #tpu.memory_space<smem>>
    %52 = vector.broadcast %51 : f32 to vector<1x512xf32>
    %53 = arith.mulf %50, %52 : vector<1x512xf32>
    %54 = arith.addf %45, %53 : vector<1x512xf32>
    %c1_32 = arith.constant 1 : index
    %c5_33 = arith.constant 5 : index
    %55 = memref.load %arg1[%c1_32, %c5_33] : memref<2x8xf32, #tpu.memory_space<smem>>
    %56 = vector.broadcast %55 : f32 to vector<1x512xf32>
    %57 = arith.mulf %50, %56 : vector<1x512xf32>
    %58 = arith.addf %49, %57 : vector<1x512xf32>
    %59 = arith.maximumf %54, %58 : vector<1x512xf32>
    %60 = arith.subf %54, %59 : vector<1x512xf32>
    %61 = math.exp %60 : vector<1x512xf32>
    %62 = arith.subf %58, %59 : vector<1x512xf32>
    %63 = math.exp %62 : vector<1x512xf32>
    %64 = arith.addf %61, %63 : vector<1x512xf32>
    %65 = tpu.reciprocal %64 : vector<1x512xf32> -> vector<1x512xf32>
    %66 = arith.mulf %61, %65 : vector<1x512xf32>
    %c0_34 = arith.constant 0 : index
    %c0_35 = arith.constant 0 : index
    %67 = vector.load %arg3[%c0_34, %c0_35] : memref<2x512xf32, #tpu.memory_space<vmem>>, vector<1x512xf32>
    tpu.vector_store %arg3[%c0_34, %c0_35], %66 {strides = array<i32>} : memref<2x512xf32, #tpu.memory_space<vmem>>, vector<1x512xf32>,
    %68 = arith.mulf %63, %65 : vector<1x512xf32>
    %c1_36 = arith.constant 1 : index
    %c0_37 = arith.constant 0 : index
    %69 = vector.load %arg3[%c1_36, %c0_37] : memref<2x512xf32, #tpu.memory_space<vmem>>, vector<1x512xf32>
    tpu.vector_store %arg3[%c1_36, %c0_37], %68 {strides = array<i32>} : memref<2x512xf32, #tpu.memory_space<vmem>>, vector<1x512xf32>,
    return
  }
}

</mosaic_0001>

<llo_original>
// kernel: objectness_forward.1
$region0: #{objectness_forward.1}
  #allocation0 [shape = 'u32[]', space=smem, size = 0x4, offset = 0x4, fixed_abs, tag = 'smem constant byte address 0x4 - core index']
  #allocation1 [shape = 'u32[144,128]{1,0:T(1,128)}', space=vmem, size = 0x12000, scoped, tag = 'internal scratch']
  %s0 = inlined_call_operand.vmem [shape: f32[8,512], index: 0, kind: input, shape index: {}]
  %s1 = inlined_call_operand.vmem [shape: f32[2,8], index: 1, kind: input, shape index: {}]
  %s2 = inlined_call_operand.vmem [shape: f32[2], index: 2, kind: input, shape index: {}]
  %s3 = inlined_call_operand.vmem [shape: f32[2,512], index: 3, kind: output, shape index: {}]
  %s4 = sld [smem:[#allocation0]]
  $region30: #{objectness_forward.1} parent=0
    _
  %s6 = ssub.s32 1, %s4
  %s7 = scalar_select 0, %s6, %s4
  $region1: #{objectness_forward.1} parent=0
    #allocation2 [shape = 'u8[1024]{0}', space=smem, size = 0x400, scoped, tag = 'input window, operand 1, single buffered']
    #allocation3 [shape = 's32[1]{0}', space=sflag, size = 0x4, scoped, tag = 'scoped memory for objectness_forward.1']
    #allocation4 [shape = 'u8[512]{0}', space=smem, size = 0x200, scoped, tag = 'input window, operand 2, single buffered']
    #allocation5 [shape = 's32[1]{0}', space=sflag, size = 0x4, scoped, tag = 'scoped memory for objectness_forward.1']
    %8 = vsyncpa [#allocation3], 0
    %9 = vsyncpa [#allocation5], 0
    // Predicated region
    $region2: #{objectness_forward.1} parent=1 // pred_check
      _
    $region3: #{objectness_forward.1} parent=1 // pred_check_branch
      %11 = sbr.rel (0) target = $region5
    $region4: #{objectness_forward.1} parent=1 // pred_region
      _
    $region5: #{objectness_forward.1} parent=1 // pred_fallthru
      _
    // Predicated region
    $region6: #{objectness_forward.1} parent=1 // pred_check
      _
    $region7: #{objectness_forward.1} parent=1 // pred_check_branch
      %13 = sbr.rel (0) target = $region9
    $region8: #{objectness_forward.1} parent=1 // pred_region
      %s15 = ssub.s32 32, 32
      %16 = vsyncadd [#allocation3], %s15
      %s18 = sshll.u32 %s1, 4
      %s19 = int_to_ptr.vmem [resolvable:$true] %s18
      %21 = dma.vmem_to_smem %s19, 32, [#allocation2], [#allocation3]
    $region9: #{objectness_forward.1} parent=1 // pred_fallthru
      _
    // Predicated region
    $region10: #{objectness_forward.1} parent=1 // pred_check
      _
    $region11: #{objectness_forward.1} parent=1 // pred_check_branch
      %23 = sbr.rel (0) target = $region13
    $region12: #{objectness_forward.1} parent=1 // pred_region
      %s25 = ssub.s32 16, 16
      %26 = vsyncadd [#allocation5], %s25
      %s28 = sshll.u32 %s2, 4
      %s29 = int_to_ptr.vmem [resolvable:$true] %s28
      %31 = dma.vmem_to_smem %s29, 16, [#allocation4], [#allocation5]
    $region13: #{objectness_forward.1} parent=1 // pred_fallthru
      _
    // Predicated region
    $region14: #{objectness_forward.1} parent=1 // pred_check
      _
    $region15: #{objectness_forward.1} parent=1 // pred_check_branch
      %33 = sbr.rel (0) target = $region17
    $region16: #{objectness_forward.1} parent=1 // pred_region
      %34 = dma.done [#allocation3], 32
    $region17: #{objectness_forward.1} parent=1 // pred_fallthru
      _
    // Predicated region
    $region18: #{objectness_forward.1} parent=1 // pred_check
      _
    $region19: #{objectness_forward.1} parent=1 // pred_check_branch
      %36 = sbr.rel (0) target = $region21
    $region20: #{objectness_forward.1} parent=1 // pred_region
      %37 = dma.done [#allocation5], 16
    $region21: #{objectness_forward.1} parent=1 // pred_fallthru
      _
    %38 = sfence
    %v39 = vld [vmem:[%s0] ss:$8 sm:$0xf]
    %s40 = sld [smem:[#allocation2]]
    %v41 = vstv %s40
    %v42 = vmul.f32 %v39, %v41
    %s43 = sld [smem:[#allocation4]]
    %v44 = vstv %s43
    %v45 = vadd.f32 %v42, %v44
    %s46 = sld [smem:[#allocation2 + $0x80]]
    %v47 = vstv %s46
    %v48 = vmul.f32 %v39, %v47
    %s49 = sld [smem:[#allocation4 + $0x1]]
    %v50 = vstv %s49
    %v51 = vadd.f32 %v48, %v50
    %s52 = scalar_lea.vmem %s0, 1
    %v53 = vld [vmem:[%s52] ss:$8 sm:$0xf]
    %s54 = sld [smem:[#allocation2 + $0x1]]
    %v55 = vstv %s54
    %v56 = vmul.f32 %v53, %v55
    %v57 = vadd.f32 %v45, %v56
    %s58 = sld [smem:[#allocation2 + $0x81]]
    %v59 = vstv %s58
    %v60 = vmul.f32 %v53, %v59
    %v61 = vadd.f32 %v51, %v60
    %s62 = scalar_lea.vmem %s0, 2
    %v63 = vld [vmem:[%s62] ss:$8 sm:$0xf]
    %s64 = sld [smem:[#allocation2 + $0x2]]
    %v65 = vstv %s64
    %v66 = vmul.f32 %v63, %v65
    %v67 = vadd.f32 %v57, %v66
    %s68 = sld [smem:[#allocation2 + $0x82]]
    %v69 = vstv %s68
    %v70 = vmul.f32 %v63, %v69
    %v71 = vadd.f32 %v61, %v70
    %s72 = scalar_lea.vmem %s0, 3
    %v73 = vld [vmem:[%s72] ss:$8 sm:$0xf]
    %s74 = sld [smem:[#allocation2 + $0x3]]
    %v75 = vstv %s74
    %v76 = vmul.f32 %v73, %v75
    %v77 = vadd.f32 %v67, %v76
    %s78 = sld [smem:[#allocation2 + $0x83]]
    %v79 = vstv %s78
    %v80 = vmul.f32 %v73, %v79
    %v81 = vadd.f32 %v71, %v80
    %s82 = scalar_lea.vmem %s0, 4
    %v83 = vld [vmem:[%s82] ss:$8 sm:$0xf]
    %s84 = sld [smem:[#allocation2 + $0x4]]
    %v85 = vstv %s84
    %v86 = vmul.f32 %v83, %v85
    %v87 = vadd.f32 %v77, %v86
    %s88 = sld [smem:[#allocation2 + $0x84]]
    %v89 = vstv %s88
    %v90 = vmul.f32 %v83, %v89
    %v91 = vadd.f32 %v81, %v90
    %s92 = scalar_lea.vmem %s0, 5
    %v93 = vld [vmem:[%s92] ss:$8 sm:$0xf]
    %s94 = sld [smem:[#allocation2 + $0x5]]
    %v95 = vstv %s94
    %v96 = vmul.f32 %v93, %v95
    %v97 = vadd.f32 %v87, %v96
    %s98 = sld [smem:[#allocation2 + $0x85]]
    %v99 = vstv %s98
    %v100 = vmul.f32 %v93, %v99
    %v101 = vadd.f32 %v91, %v100
    %v102 = vmax.f32 %v97, %v101
    %v103 = vsub.f32 %v97, %v102
    %v104 = vmul.f32 %v103, 1.442695
    %v105 = vpow.pop %v104
    %v106 = vsub.f32 %v101, %v102
    %v107 = vmul.f32 %v106, 1.442695
    %v108 = vpow.pop %v107
    %v109 = vadd.f32 %v105, %v108
    %v110 = vrcp.pop %v109
    %v111 = vmul.f32 %v105, %v110
    %v112 = vlaneseq
    %vm113 = vcmp.ge.s32.totalorder %v112, 0
    %vm114 = vcmp.lt.s32.totalorder %v112, 512
    %vm115 = vmand %vm113, %vm114
    %116 = vst.msk [vmem:[%s3] ss:$2 sm:$0xf] %vm115, %v111
    %v117 = vmul.f32 %v108, %v110
    %s118 = scalar_lea.vmem %s3, 1
    %119 = vst.msk [vmem:[%s118] ss:$2 sm:$0xf] %vm115, %v117
    // Predicated region
    $region22: #{objectness_forward.1} parent=1 // pred_check
      _
    $region23: #{objectness_forward.1} parent=1 // pred_check_branch
      %121 = sbr.rel (0) target = $region25
    $region24: #{objectness_forward.1} parent=1 // pred_region
      _
    $region25: #{objectness_forward.1} parent=1 // pred_fallthru
      _
    // Predicated region
    $region26: #{objectness_forward.1} parent=1 // pred_check
      _
    $region27: #{objectness_forward.1} parent=1 // pred_check_branch
      %123 = sbr.rel (0) target = $region29
    $region28: #{objectness_forward.1} parent=1 // pred_region
      _
    $region29: #{objectness_forward.1} parent=1 // pred_fallthru
      _
    %124 = vsyncpa [#allocation3], 1
    %125 = vsyncpa [#allocation5], 1

</llo_original>
